<compile_context>
chip_gen: v5e
topology: v5e:2x2
jax: 0.10.0
libtpu: 0.0.40
codegen_flags: <defaults>
</compile_context>

<pallas_src>
import functools
import math

import jax
import jax.numpy as jnp
from jax.experimental import pallas as pl
from jax.experimental.pallas import tpu as pltpu


# ----------------------------- fused Pallas kernel -----------------------------

def _tattention_kernel(x_ref, w1t_ref, wallt_ref, ball_ref, o_ref, *,
                       inv_hw, inv_temp, k_off, k_len, n_valid, do_kernel_softmax):
    # Global average pool over the lane-dense spatial axis: (B, C, HW) -> (B, C).
    pooled = jnp.sum(x_ref[...], axis=-1) * inv_hw
    # linear_projection (1x1 conv, bias=False) + ReLU: (B, C) @ (C, R) -> (B, R).
    h = jnp.dot(pooled, w1t_ref[...], preferred_element_type=jnp.float32)
    h = jnp.maximum(h, 0.0)
    # All four projection heads fused into one matmul: (B, R) @ (R, Tp) + b -> (B, Tp).
    logits = jnp.dot(h, wallt_ref[...], preferred_element_type=jnp.float32) + ball_ref[...]
    z = logits * inv_temp

    lane = jax.lax.broadcasted_iota(jnp.int32, z.shape, 1)
    valid = lane < n_valid
    # sigmoid for the channel / filter / spatial slices (EUP exp + EUP reciprocal).
    out = pl.reciprocal(1.0 + jnp.exp(-z), approx=True)

    if do_kernel_softmax:
        # masked softmax over the kernel-attention slice only.
        in_k = jnp.logical_and(lane >= k_off, lane < k_off + k_len)
        zk = jnp.where(in_k, z, -1e30)
        zmax = jnp.max(zk, axis=-1, keepdims=True)
        e = jnp.where(in_k, jnp.exp(zk - zmax), 0.0)
        denom = jnp.sum(e, axis=-1, keepdims=True)
        sm = e * pl.reciprocal(denom, approx=True)
        out = jnp.where(in_k, sm, out)

    o_ref[...] = jnp.where(valid, out, 0.0)


# ----------------------------- host-side plumbing -----------------------------

def _head_layout(embed_dim, num_heads, kernel_size, num_kernels, num_channels):
    """Offsets/lengths of each active projection head in the concatenated output."""
    slices = {}
    off = 0
    slices["channel"] = (off, embed_dim); off += embed_dim
    if not (embed_dim == num_channels and embed_dim == num_heads):
        slices["filter"] = (off, num_heads); off += num_heads
    if kernel_size != 1:
        slices["spatial"] = (off, kernel_size * kernel_size); off += kernel_size * kernel_size
    if num_kernels != 1:
        slices["kernel"] = (off, num_kernels); off += num_kernels
    return slices, off


def make_params(key, embed_dim, num_heads, kernel_size, num_kernels,
                num_channels=1, reduction_ratio=0.0625, min_channels=16):
    """Mimics TAttention.__init__/initialize_weights: kaiming-normal conv weights, zero biases."""
    reduced = max(int(embed_dim * reduction_ratio), min_channels)
    ks = jax.random.split(key, 5)

    def kaiming(k, out_c, in_c):
        std = math.sqrt(2.0 / out_c)   # fan_out mode, relu gain, 1x1 conv
        return std * jax.random.normal(k, (out_c, in_c), jnp.float32)

    p = {"linear_projection_w": kaiming(ks[0], reduced, embed_dim)}           # bias=False
    p["channel_projection_w"] = kaiming(ks[1], embed_dim, reduced)
    p["channel_projection_b"] = jnp.zeros((embed_dim,), jnp.float32)
    if not (embed_dim == num_channels and embed_dim == num_heads):
        p["filter_projection_w"] = kaiming(ks[2], num_heads, reduced)
        p["filter_projection_b"] = jnp.zeros((num_heads,), jnp.float32)
    if kernel_size != 1:
        p["spatial_projection_w"] = kaiming(ks[3], kernel_size * kernel_size, reduced)
        p["spatial_projection_b"] = jnp.zeros((kernel_size * kernel_size,), jnp.float32)
    if num_kernels != 1:
        p["kernel_projection_w"] = kaiming(ks[4], num_kernels, reduced)
        p["kernel_projection_b"] = jnp.zeros((num_kernels,), jnp.float32)
    return p


def prep_params(params, *, embed_dim, num_heads, kernel_size, num_kernels,
                num_channels=1, lane_pad=128):
    """One-time weight prep: transpose, concatenate all heads, zero-pad to 128 lanes."""
    slices, total = _head_layout(embed_dim, num_heads, kernel_size, num_kernels, num_channels)
    w1t = jnp.transpose(params["linear_projection_w"])                        # (E, R)
    ws, bs = [], []
    for name in ("channel", "filter", "spatial", "kernel"):
        if name in slices:
            ws.append(params[f"{name}_projection_w"])                         # (len, R)
            bs.append(params[f"{name}_projection_b"])
    w_all = jnp.concatenate(ws, axis=0)                                       # (T, R)
    b_all = jnp.concatenate(bs, axis=0)                                       # (T,)
    t_pad = max(lane_pad, ((total + lane_pad - 1) // lane_pad) * lane_pad)
    w_all_t = jnp.zeros((w_all.shape[1], t_pad), jnp.float32).at[:, :total].set(jnp.transpose(w_all))
    b_pad = jnp.zeros((1, t_pad), jnp.float32).at[:, :total].set(b_all)
    return {"w1t": w1t, "w_all_t": w_all_t, "b_all": b_pad}


def tattention_forward(prepped, x, *, embed_dim, num_heads, kernel_size, num_kernels,
                       num_channels=1, temperature=1.0):
    B, C, H, W = x.shape
    assert C == embed_dim
    HW = H * W
    slices, total = _head_layout(embed_dim, num_heads, kernel_size, num_kernels, num_channels)
    k_off, k_len = slices.get("kernel", (0, 0))

    x3 = x.reshape(B, C, HW)
    w1t, w_all_t, b_all = prepped["w1t"], prepped["w_all_t"], prepped["b_all"]
    R, Tp = w1t.shape[1], w_all_t.shape[1]

    kernel = functools.partial(
        _tattention_kernel,
        inv_hw=1.0 / HW, inv_temp=1.0 / temperature,
        k_off=k_off, k_len=k_len, n_valid=total,
        do_kernel_softmax=(k_len > 0))

    out = pl.pallas_call(
        kernel,
        out_shape=jax.ShapeDtypeStruct((B, Tp), jnp.float32),
        grid=(1,),
        in_specs=[
            pl.BlockSpec((B, C, HW), lambda i: (0, 0, 0)),
            pl.BlockSpec((C, R), lambda i: (0, 0)),
            pl.BlockSpec((R, Tp), lambda i: (0, 0)),
            pl.BlockSpec((1, Tp), lambda i: (0, 0)),
        ],
        out_specs=pl.BlockSpec((B, Tp), lambda i: (0, 0)),
        compiler_params=pltpu.CompilerParams(dimension_semantics=("arbitrary",)),
    )(x3, w1t, w_all_t, b_all)

    def head(name):
        if name not in slices:
            return 1.0                      # identity branch of the torch module
        off, ln = slices[name]
        return out[:, off:off + ln]

    ch = head("channel").reshape(B, -1, 1, 1)
    filt = head("filter")
    filt = filt if isinstance(filt, float) else filt.reshape(B, -1, 1, 1)
    sp = head("spatial")
    sp = sp if isinstance(sp, float) else sp.reshape(B, 1, 1, 1, kernel_size, kernel_size)
    kern = head("kernel")
    kern = kern if isinstance(kern, float) else kern.reshape(B, -1, 1, 1, 1, 1)
    return ch, filt, sp, kern


# pure-jnp reference (for in-script numerical verification)
def tattention_reference(params, x, *, embed_dim, num_heads, kernel_size, num_kernels,
                         num_channels=1, temperature=1.0):
    B = x.shape[0]
    pooled = jnp.mean(x, axis=(2, 3))
    h = jnp.maximum(pooled @ params["linear_projection_w"].T, 0.0)
    ch = jax.nn.sigmoid((h @ params["channel_projection_w"].T + params["channel_projection_b"])
                        / temperature).reshape(B, -1, 1, 1)
    if embed_dim == num_channels and embed_dim == num_heads:
        filt = 1.0
    else:
        filt = jax.nn.sigmoid((h @ params["filter_projection_w"].T + params["filter_projection_b"])
                              / temperature).reshape(B, -1, 1, 1)
    if kernel_size == 1:
        sp = 1.0
    else:
        sp = jax.nn.sigmoid((h @ params["spatial_projection_w"].T + params["spatial_projection_b"])
                            / temperature).reshape(B, 1, 1, 1, kernel_size, kernel_size)
    if num_kernels == 1:
        kern = 1.0
    else:
        kl = (h @ params["kernel_projection_w"].T + params["kernel_projection_b"]) / temperature
        kern = jax.nn.softmax(kl, axis=1).reshape(B, -1, 1, 1, 1, 1)
    return ch, filt, sp, kern


# ----------------------------- main -----------------------------

if __name__ == "__main__":
    B, embed_dim, H, W = 2, 64, 16, 16
    num_heads, kernel_size, num_kernels = 8, 3, 4
    num_channels = 1

    key = jax.random.PRNGKey(0)
    kx, kp = jax.random.split(key)
    x = jax.random.normal(kx, (B, embed_dim, H, W), jnp.float32)
    params = make_params(kp, embed_dim, num_heads, kernel_size, num_kernels,
                         num_channels=num_channels)
    prepped = prep_params(params, embed_dim=embed_dim, num_heads=num_heads,
                          kernel_size=kernel_size, num_kernels=num_kernels,
                          num_channels=num_channels)

    fwd = jax.jit(functools.partial(
        tattention_forward, embed_dim=embed_dim, num_heads=num_heads,
        kernel_size=kernel_size, num_kernels=num_kernels,
        num_channels=num_channels, temperature=1.0))

    ch, filt, sp, kern = jax.block_until_ready(fwd(prepped, x))

    assert ch.shape == (B, embed_dim, 1, 1)
    assert filt.shape == (B, num_heads, 1, 1)
    assert sp.shape == (B, 1, 1, 1, kernel_size, kernel_size)
    assert kern.shape == (B, num_kernels, 1, 1, 1, 1)
    for a in (ch, filt, sp, kern):
        assert a.dtype == jnp.float32
        assert bool(jnp.all(jnp.isfinite(a)))

    rch, rfilt, rsp, rkern = tattention_reference(
        params, x, embed_dim=embed_dim, num_heads=num_heads, kernel_size=kernel_size,
        num_kernels=num_kernels, num_channels=num_channels, temperature=1.0)
    for got, ref in ((ch, rch), (filt, rfilt), (sp, rsp), (kern, rkern)):
        assert bool(jnp.allclose(got, ref, rtol=2e-2, atol=2e-2))
    assert bool(jnp.allclose(jnp.sum(kern, axis=1), 1.0, atol=1e-2))

    print("KERNEL_OK")
</pallas_src>

<mosaic_0001>
module attributes {stable_mosaic.version = 11 : i64} {
  func.func @_tattention_kernel(%arg0: i32, %arg1: memref<2x64x256xf32, #tpu.memory_space<vmem>>, %arg2: memref<64x16xf32, #tpu.memory_space<vmem>>, %arg3: memref<16x128xf32, #tpu.memory_space<vmem>>, %arg4: memref<1x128xf32, #tpu.memory_space<vmem>>, %arg5: memref<2x128xf32, #tpu.memory_space<vmem>>) attributes {dimension_semantics = [#tpu.dimension_semantics<arbitrary>], iteration_bounds = array<i64: 1>, scalar_prefetch = 0 : i64, scratch_operands = 0 : i64, tpu.core_type = #tpu.core_type<tc>, window_params = [{pipeline_mode = #tpu.pipeline_mode<synchronous>, transform_indices = @transform_0, window_bounds = array<i64: 2, 64, 256>}, {pipeline_mode = #tpu.pipeline_mode<synchronous>, transform_indices = @transform_1, window_bounds = array<i64: 64, 16>}, {pipeline_mode = #tpu.pipeline_mode<synchronous>, transform_indices = @transform_2, window_bounds = array<i64: 16, 128>}, {pipeline_mode = #tpu.pipeline_mode<synchronous>, transform_indices = @transform_3, window_bounds = array<i64: 1, 128>}, {pipeline_mode = #tpu.pipeline_mode<synchronous>, transform_indices = @transform_4, window_bounds = array<i64: 2, 128>}]} {
    %c0 = arith.constant 0 : index
    %c0_0 = arith.constant 0 : index
    %c0_1 = arith.constant 0 : index
    %0 = vector.load %arg1[%c0, %c0_0, %c0_1] : memref<2x64x256xf32, #tpu.memory_space<vmem>>, vector<2x64x256xf32>
    %cst = arith.constant dense<0.000000e+00> : vector<2x64xf32>
    %1 = vector.multi_reduction <add>, %0, %cst [2] : vector<2x64x256xf32> to vector<2x64xf32>
    %cst_2 = arith.constant 3.906250e-03 : f32
    %2 = vector.broadcast %cst_2 : f32 to vector<2x64xf32>
    %3 = arith.mulf %1, %2 : vector<2x64xf32>
    %c0_3 = arith.constant 0 : index
    %c0_4 = arith.constant 0 : index
    %4 = vector.load %arg2[%c0_3, %c0_4] : memref<64x16xf32, #tpu.memory_space<vmem>>, vector<64x16xf32>
    %cst_5 = arith.constant dense<0.000000e+00> : vector<2x16xf32>
    %5 = tpu.matmul %3, %4, %cst_5 {dimension_numbers = #tpu.dot_dimension_numbers<[1], [0], [0], [1], [0, 0, 1, 1], [], []>} : vector<2x64xf32>, vector<64x16xf32>, vector<2x16xf32> -> vector<2x16xf32>
    %cst_6 = arith.constant 0.000000e+00 : f32
    %6 = vector.broadcast %cst_6 : f32 to vector<2x16xf32>
    %7 = arith.maximumf %5, %6 : vector<2x16xf32>
    %c0_7 = arith.constant 0 : index
    %c0_8 = arith.constant 0 : index
    %8 = vector.load %arg3[%c0_7, %c0_8] : memref<16x128xf32, #tpu.memory_space<vmem>>, vector<16x128xf32>
    %cst_9 = arith.constant dense<0.000000e+00> : vector<2x128xf32>
    %9 = tpu.matmul %7, %8, %cst_9 {dimension_numbers = #tpu.dot_dimension_numbers<[1], [0], [0], [1], [0, 0, 1, 1], [], []>} : vector<2x16xf32>, vector<16x128xf32>, vector<2x128xf32> -> vector<2x128xf32>
    %c0_10 = arith.constant 0 : index
    %c0_11 = arith.constant 0 : index
    %10 = vector.load %arg4[%c0_10, %c0_11] : memref<1x128xf32, #tpu.memory_space<vmem>>, vector<1x128xf32>
    %11 = vector.broadcast %10 : vector<1x128xf32> to vector<2x128xf32>
    %12 = arith.addf %9, %11 : vector<2x128xf32>
    %cst_12 = arith.constant 1.000000e+00 : f32
    %13 = vector.broadcast %cst_12 : f32 to vector<2x128xf32>
    %14 = arith.mulf %12, %13 : vector<2x128xf32>
    %15 = tpu.iota {dimensions = array<i32: 1>} : vector<2x128xi32>
    %c85_i32 = arith.constant 85 : i32
    %16 = vector.broadcast %c85_i32 : i32 to vector<2x128xi32>
    %17 = arith.cmpi slt, %15, %16 : vector<2x128xi32>
    %cst_13 = arith.constant 0.000000e+00 : f32
    %18 = vector.broadcast %cst_13 : f32 to vector<2x128xf32>
    %19 = arith.subf %18, %14 : vector<2x128xf32>
    %20 = math.exp %19 : vector<2x128xf32>
    %cst_14 = arith.constant 1.000000e+00 : f32
    %21 = vector.broadcast %cst_14 : f32 to vector<2x128xf32>
    %22 = arith.addf %21, %20 : vector<2x128xf32>
    %23 = tpu.reciprocal %22 {approx = true} : vector<2x128xf32> -> vector<2x128xf32>
    %c81_i32 = arith.constant 81 : i32
    %24 = vector.broadcast %c81_i32 : i32 to vector<2x128xi32>
    %25 = arith.cmpi sge, %15, %24 : vector<2x128xi32>
    %c85_i32_15 = arith.constant 85 : i32
    %26 = vector.broadcast %c85_i32_15 : i32 to vector<2x128xi32>
    %27 = arith.cmpi slt, %15, %26 : vector<2x128xi32>
    %28 = arith.andi %25, %27 : vector<2x128xi1>
    %cst_16 = arith.constant -1.000000e+30 : f32
    %29 = vector.broadcast %cst_16 : f32 to vector<2x128xf32>
    %30 = arith.select %28, %14, %29 : vector<2x128xi1>, vector<2x128xf32>
    %cst_17 = arith.constant dense<0xFF800000> : vector<2xf32>
    %31 = vector.multi_reduction <maximumf>, %30, %cst_17 [1] : vector<2x128xf32> to vector<2xf32>
    %32 = vector.shape_cast %31 : vector<2xf32> to vector<2x1xf32>
    %33 = vector.broadcast %32 : vector<2x1xf32> to vector<2x128xf32>
    %34 = arith.subf %30, %33 : vector<2x128xf32>
    %35 = math.exp %34 : vector<2x128xf32>
    %cst_18 = arith.constant 0.000000e+00 : f32
    %36 = vector.broadcast %cst_18 : f32 to vector<2x128xf32>
    %37 = arith.select %28, %35, %36 : vector<2x128xi1>, vector<2x128xf32>
    %cst_19 = arith.constant dense<0.000000e+00> : vector<2xf32>
    %38 = vector.multi_reduction <add>, %37, %cst_19 [1] : vector<2x128xf32> to vector<2xf32>
    %39 = vector.shape_cast %38 : vector<2xf32> to vector<2x1xf32>
    %40 = tpu.reciprocal %39 {approx = true} : vector<2x1xf32> -> vector<2x1xf32>
    %41 = vector.broadcast %40 : vector<2x1xf32> to vector<2x128xf32>
    %42 = arith.mulf %37, %41 : vector<2x128xf32>
    %43 = arith.select %28, %42, %23 : vector<2x128xi1>, vector<2x128xf32>
    %cst_20 = arith.constant 0.000000e+00 : f32
    %44 = vector.broadcast %cst_20 : f32 to vector<2x128xf32>
    %45 = arith.select %17, %43, %44 : vector<2x128xi1>, vector<2x128xf32>
    %c0_21 = arith.constant 0 : index
    %c0_22 = arith.constant 0 : index
    %46 = vector.load %arg5[%c0_21, %c0_22] : memref<2x128xf32, #tpu.memory_space<vmem>>, vector<2x128xf32>
    tpu.vector_store %arg5[%c0_21, %c0_22], %45 {strides = array<i32>} : memref<2x128xf32, #tpu.memory_space<vmem>>, vector<2x128xf32>,
    return
  }
  func.func @transform_0(%arg0: i32) -> (i32, i32, i32) {
    %c0_i32 = arith.constant 0 : i32
    %c0_i32_0 = arith.constant 0 : i32
    %c0_i32_1 = arith.constant 0 : i32
    %c0_i32_2 = arith.constant 0 : i32
    return %c0_i32, %c0_i32_0, %c0_i32_1 : i32, i32, i32
  }
  func.func @transform_1(%arg0: i32) -> (i32, i32) {
    %c0_i32 = arith.constant 0 : i32
    %c0_i32_0 = arith.constant 0 : i32
    %c0_i32_1 = arith.constant 0 : i32
    return %c0_i32, %c0_i32_0 : i32, i32
  }
  func.func @transform_2(%arg0: i32) -> (i32, i32) {
    %c0_i32 = arith.constant 0 : i32
    %c0_i32_0 = arith.constant 0 : i32
    %c0_i32_1 = arith.constant 0 : i32
    return %c0_i32, %c0_i32_0 : i32, i32
  }
  func.func @transform_3(%arg0: i32) -> (i32, i32) {
    %c0_i32 = arith.constant 0 : i32
    %c0_i32_0 = arith.constant 0 : i32
    %c0_i32_1 = arith.constant 0 : i32
    return %c0_i32, %c0_i32_0 : i32, i32
  }
  func.func @transform_4(%arg0: i32) -> (i32, i32) {
    %c0_i32 = arith.constant 0 : i32
    %c0_i32_0 = arith.constant 0 : i32
    %c0_i32_1 = arith.constant 0 : i32
    return %c0_i32, %c0_i32_0 : i32, i32
  }
}

</mosaic_0001>

<llo_original>
// kernel: tattention_forward.1
$region0: #{tattention_forward.1}
  #allocation0 [shape = 'u32[]', space=smem, size = 0x4, offset = 0x4, fixed_abs, tag = 'smem constant byte address 0x4 - core index']
  #allocation1 [shape = 'u32[72,128]{1,0:T(1,128)}', space=vmem, size = 0x9000, scoped, tag = 'internal scratch']
  %s0 = inlined_call_operand.vmem [shape: f32[2,64,256], index: 0, kind: input, shape index: {}]
  %s1 = inlined_call_operand.vmem [shape: f32[64,16], index: 1, kind: input, shape index: {}]
  %s2 = inlined_call_operand.vmem [shape: f32[16,128], index: 2, kind: input, shape index: {}]
  %s3 = inlined_call_operand.vmem [shape: f32[1,128], index: 3, kind: input, shape index: {}]
  %s4 = inlined_call_operand.vmem [shape: f32[2,128], index: 4, kind: output, shape index: {}]
  %s5 = sld [smem:[#allocation0]]
  $region26: #{tattention_forward.1} parent=0
    _
  %s7 = ssub.s32 1, %s5
  %s8 = scalar_select 0, %s7, %s5
  // Predicated region
  $region2: #{tattention_forward.1} parent=0 // pred_check
    _
  $region3: #{tattention_forward.1} parent=0 // pred_check_branch
    %10 = sbr.rel (0) target = $region5
  $region4: #{tattention_forward.1} parent=0 // pred_region
    _
  $region5: #{tattention_forward.1} parent=0 // pred_fallthru
    _
  // Predicated region
  $region6: #{tattention_forward.1} parent=0 // pred_check
    _
  $region7: #{tattention_forward.1} parent=0 // pred_check_branch
    %12 = sbr.rel (0) target = $region9
  $region8: #{tattention_forward.1} parent=0 // pred_region
    _
  $region9: #{tattention_forward.1} parent=0 // pred_fallthru
    _
  // Predicated region
  $region10: #{tattention_forward.1} parent=0 // pred_check
    _
  $region11: #{tattention_forward.1} parent=0 // pred_check_branch
    %14 = sbr.rel (0) target = $region13
  $region12: #{tattention_forward.1} parent=0 // pred_region
    _
  $region13: #{tattention_forward.1} parent=0 // pred_fallthru
    _
  // Predicated region
  $region14: #{tattention_forward.1} parent=0 // pred_check
    _
  $region15: #{tattention_forward.1} parent=0 // pred_check_branch
    %16 = sbr.rel (0) target = $region17
  $region16: #{tattention_forward.1} parent=0 // pred_region
    _
  $region17: #{tattention_forward.1} parent=0 // pred_fallthru
    _
  %v17 = vld [vmem:[%s0] sm:$0xff]
  %v18 = vld [vmem:[%s0 + $0x8] sm:$0xff]
  %v19 = vld [vmem:[%s0 + $0x10] sm:$0xff]
  %v20 = vld [vmem:[%s0 + $0x18] sm:$0xff]
  %v21 = vld [vmem:[%s0 + $0x20] sm:$0xff]
  %v22 = vld [vmem:[%s0 + $0x28] sm:$0xff]
  %v23 = vld [vmem:[%s0 + $0x30] sm:$0xff]
  %v24 = vld [vmem:[%s0 + $0x38] sm:$0xff]
  %v25 = vld [vmem:[%s0 + $0x40] sm:$0xff]
  %v26 = vld [vmem:[%s0 + $0x48] sm:$0xff]
  %v27 = vld [vmem:[%s0 + $0x50] sm:$0xff]
  %v28 = vld [vmem:[%s0 + $0x58] sm:$0xff]
  %v29 = vld [vmem:[%s0 + $0x60] sm:$0xff]
  %v30 = vld [vmem:[%s0 + $0x68] sm:$0xff]
  %v31 = vld [vmem:[%s0 + $0x70] sm:$0xff]
  %v32 = vld [vmem:[%s0 + $0x78] sm:$0xff]
  %v33 = vld [vmem:[%s0 + $0x80] sm:$0xff]
  %v34 = vld [vmem:[%s0 + $0x88] sm:$0xff]
  %v35 = vld [vmem:[%s0 + $0x90] sm:$0xff]
  %v36 = vld [vmem:[%s0 + $0x98] sm:$0xff]
  %v37 = vld [vmem:[%s0 + $0xa0] sm:$0xff]
  %v38 = vld [vmem:[%s0 + $0xa8] sm:$0xff]
  %v39 = vld [vmem:[%s0 + $0xb0] sm:$0xff]
  %v40 = vld [vmem:[%s0 + $0xb8] sm:$0xff]
  %v41 = vld [vmem:[%s0 + $0xc0] sm:$0xff]
  %v42 = vld [vmem:[%s0 + $0xc8] sm:$0xff]
  %v43 = vld [vmem:[%s0 + $0xd0] sm:$0xff]
  %v44 = vld [vmem:[%s0 + $0xd8] sm:$0xff]
  %v45 = vld [vmem:[%s0 + $0xe0] sm:$0xff]
  %v46 = vld [vmem:[%s0 + $0xe8] sm:$0xff]
  %v47 = vld [vmem:[%s0 + $0xf0] sm:$0xff]
  %v48 = vld [vmem:[%s0 + $0xf8] sm:$0xff]
  %v49 = vadd.f32 %v17, %v18
  %50 = vadd.xlane.f32.xlu0 %v49
  %v51 = vpop.xlane.xlu0 %50
  %v52 = vadd.f32 %v19, %v20
  %53 = vadd.xlane.f32.xlu0 %v52
  %v54 = vpop.xlane.xlu0 %53
  %v55 = vadd.f32 %v21, %v22
  %56 = vadd.xlane.f32.xlu0 %v55
  %v57 = vpop.xlane.xlu0 %56
  %v58 = vadd.f32 %v23, %v24
  %59 = vadd.xlane.f32.xlu0 %v58
  %v60 = vpop.xlane.xlu0 %59
  %v61 = vadd.f32 %v25, %v26
  %62 = vadd.xlane.f32.xlu0 %v61
  %v63 = vpop.xlane.xlu0 %62
  %v64 = vadd.f32 %v27, %v28
  %65 = vadd.xlane.f32.xlu0 %v64
  %v66 = vpop.xlane.xlu0 %65
  %v67 = vadd.f32 %v29, %v30
  %68 = vadd.xlane.f32.xlu0 %v67
  %v69 = vpop.xlane.xlu0 %68
  %v70 = vadd.f32 %v31, %v32
  %71 = vadd.xlane.f32.xlu0 %v70
  %v72 = vpop.xlane.xlu0 %71
  %v73 = vadd.f32 %v33, %v34
  %74 = vadd.xlane.f32.xlu0 %v73
  %v75 = vpop.xlane.xlu0 %74
  %v76 = vadd.f32 %v35, %v36
  %77 = vadd.xlane.f32.xlu0 %v76
  %v78 = vpop.xlane.xlu0 %77
  %v79 = vadd.f32 %v37, %v38
  %80 = vadd.xlane.f32.xlu0 %v79
  %v81 = vpop.xlane.xlu0 %80
  %v82 = vadd.f32 %v39, %v40
  %83 = vadd.xlane.f32.xlu0 %v82
  %v84 = vpop.xlane.xlu0 %83
  %v85 = vadd.f32 %v41, %v42
  %86 = vadd.xlane.f32.xlu0 %v85
  %v87 = vpop.xlane.xlu0 %86
  %v88 = vadd.f32 %v43, %v44
  %89 = vadd.xlane.f32.xlu0 %v88
  %v90 = vpop.xlane.xlu0 %89
  %v91 = vadd.f32 %v45, %v46
  %92 = vadd.xlane.f32.xlu0 %v91
  %v93 = vpop.xlane.xlu0 %92
  %v94 = vadd.f32 %v47, %v48
  %95 = vadd.xlane.f32.xlu0 %v94
  %v96 = vpop.xlane.xlu0 %95
  %v97 = vmul.f32 %v51, 0.00390625
  %v98 = vmul.f32 %v54, 0.00390625
  %v99 = vmul.f32 %v57, 0.00390625
  %v100 = vmul.f32 %v60, 0.00390625
  %v101 = vmul.f32 %v63, 0.00390625
  %v102 = vmul.f32 %v66, 0.00390625
  %v103 = vmul.f32 %v69, 0.00390625
  %v104 = vmul.f32 %v72, 0.00390625
  %v105 = vmul.f32 %v75, 0.00390625
  %v106 = vmul.f32 %v78, 0.00390625
  %v107 = vmul.f32 %v81, 0.00390625
  %v108 = vmul.f32 %v84, 0.00390625
  %v109 = vmul.f32 %v87, 0.00390625
  %v110 = vmul.f32 %v90, 0.00390625
  %v111 = vmul.f32 %v93, 0.00390625
  %v112 = vmul.f32 %v96, 0.00390625
  %v113 = vld [vmem:[%s1] sm:$0xff]
  %v114 = vld [vmem:[%s1 + $0x8] sm:$0xff]
  %v115 = vld [vmem:[%s1 + $0x10] sm:$0xff]
  %v116 = vld [vmem:[%s1 + $0x18] sm:$0xff]
  %v117 = vld [vmem:[%s1 + $0x20] sm:$0xff]
  %v118 = vld [vmem:[%s1 + $0x28] sm:$0xff]
  %v119 = vld [vmem:[%s1 + $0x30] sm:$0xff]
  %v120 = vld [vmem:[%s1 + $0x38] sm:$0xff]
  %v137 = vlaneseq
  %v138 = vand.u32 %v137, 127
  %v139 = vperm.slane %v97, %v138
  %v140 = vadd.s32 %v138, 4294967288
  %v141 = vperm.slane %v98, %v140
  %vm142 = vcmask 130112
  %v143 = vsel %vm142, %v141, %v139
  %v144 = vadd.s32 %v138, 4294967280
  %v145 = vperm.slane %v99, %v144
  %vm146 = vcmask 195712
  %v147 = vsel %vm146, %v145, %v143
  %v148 = vadd.s32 %v138, 4294967272
  %v149 = vperm.slane %v100, %v148
  %vm150 = vcmask 261312
  %v151 = vsel %vm150, %v149, %v147
  %v152 = vadd.s32 %v138, 4294967264
  %v153 = vperm.slane %v101, %v152
  %vm154 = vcmask 326912
  %v155 = vsel %vm154, %v153, %v151
  %v156 = vadd.s32 %v138, 4294967256
  %v157 = vperm.slane %v102, %v156
  %vm158 = vcmask 392512
  %v159 = vsel %vm158, %v157, %v155
  %v160 = vadd.s32 %v138, 4294967248
  %v161 = vperm.slane %v103, %v160
  %vm162 = vcmask 458112
  %v163 = vsel %vm162, %v161, %v159
  %v164 = vadd.s32 %v138, 4294967240
  %v165 = vperm.slane %v104, %v164
  %vm166 = vcmask 523712
  %v167 = vsel %vm166, %v165, %v163
  %v168 = vperm.slane %v105, %v138
  %v169 = vperm.slane %v106, %v140
  %v170 = vsel %vm142, %v169, %v168
  %v171 = vperm.slane %v107, %v144
  %v172 = vsel %vm146, %v171, %v170
  %v173 = vperm.slane %v108, %v148
  %v174 = vsel %vm150, %v173, %v172
  %v175 = vperm.slane %v109, %v152
  %v176 = vsel %vm154, %v175, %v174
  %v177 = vperm.slane %v110, %v156
  %v178 = vsel %vm158, %v177, %v176
  %v179 = vperm.slane %v111, %v160
  %v180 = vsel %vm162, %v179, %v178
  %v181 = vperm.slane %v112, %v164
  %v182 = vsel %vm166, %v181, %v180
  %vm183 = vcmask 1041409
  %v184 = vsel %vm183, %v182, %v167
  %vm185 = vcmask 523264
  %v186 = vsel %vm185, %v184, 0
  %188 = vmatpush.msra.mxu0 0.0
  %189 = vmatpush.msra.mxu0 0.0
  %190 = vmatpush.msra.mxu0 0.0
  %191 = vmatpush.msra.mxu0 0.0
  %192 = vmatpush.msra.mxu0 0.0
  %193 = vmatpush.msra.mxu0 0.0
  %194 = vmatpush.msra.mxu0 0.0
  %195 = vmatpush.msra.mxu0 0.0
  %196 = vmatpush.msra.mxu0 %v120
  %197 = vmatpush.msra.mxu0 %v119
  %198 = vmatpush.msra.mxu0 %v118
  %199 = vmatpush.msra.mxu0 %v117
  %200 = vmatpush.msra.mxu0 %v116
  %201 = vmatpush.msra.mxu0 %v115
  %202 = vmatpush.msra.mxu0 %v114
  %203 = vmatpush.msra.mxu0 %v113
  %204 = vmatmul.f32.gmra.mxu0 %v186
  %v205 = vpop.f32.mrf.mxu0
  %v206 = vadd.f32 0.0, %v205
  %207 = vdwg.mxu0
  %v208 = vmax.f32 %v206, 0.0
  %v209 = vld [vmem:[%s2] sm:$0xff]
  %v210 = vld [vmem:[%s2 + $0x8] sm:$0xff]
  %v211 = vld [vmem:[%s3] sm:$0x1]
  %v213 = vperm.slane %v211, 0
  %vm215 = vcmask 130048
  %v217 = vsel %vm215, %v208, 0
  %219 = vmatpush.msra.mxu0 0.0
  %220 = vmatpush.msra.mxu0 0.0
  %221 = vmatpush.msra.mxu0 0.0
  %222 = vmatpush.msra.mxu0 0.0
  %223 = vmatpush.msra.mxu0 0.0
  %224 = vmatpush.msra.mxu0 0.0
  %225 = vmatpush.msra.mxu0 0.0
  %226 = vmatpush.msra.mxu0 0.0
  %227 = vmatpush.msra.mxu0 0.0
  %228 = vmatpush.msra.mxu0 0.0
  %229 = vmatpush.msra.mxu0 0.0
  %230 = vmatpush.msra.mxu0 0.0
  %231 = vmatpush.msra.mxu0 0.0
  %232 = vmatpush.msra.mxu0 0.0
  %233 = vmatpush.msra.mxu0 %v210
  %234 = vmatpush.msra.mxu0 %v209
  %235 = vmatmul.f32.gmra.mxu0 %v217
  %v236 = vpop.f32.mrf.mxu0
  %v237 = vadd.f32 %v213, %v236
  %238 = vdwg.mxu0
  %vm239 = vcmp.lt.s32.totalorder %v138, 85
  %v240 = vsub.f32 0.0, %v237
  %v241 = vmul.f32 %v240, 1.442695
  %v242 = vpow.pop %v241
  %v243 = vadd.f32 %v242, 1.0
  %v244 = vrcp.pop %v243
  %vm245 = vcmp.ge.s32.totalorder %v138, 81
  %vm246 = vmand %vm245, %vm239
  %v247 = vsel %vm246, %v237, -1e+30
  %vm248 = vcmask 1041408
  %v249 = vsel %vm248, %v247, -inf
  %250 = vmax.xlane.f32.xlu0 %v249
  %v251 = vpop.xlane.xlu0 %250
  %v252 = vsub.f32 %v247, %v251
  %v253 = vmul.f32 %v252, 1.442695
  %v254 = vpow.pop %v253
  %v255 = vsel %vm246, %v254, 0.0
  %v256 = vsel %vm248, %v255, 0.0
  %257 = vadd.xlane.f32.xlu0 %v256
  %v258 = vpop.xlane.xlu0 %257
  %v259 = vrcp.pop %v258
  %v260 = vmul.f32 %v255, %v259
  %v261 = vsel %vm246, %v260, %v244
  %v262 = vsel %vm239, %v261, 0.0
  %263 = vst [vmem:[%s4] sm:$0x3] %v262
  // Predicated region
  $region18: #{tattention_forward.1} parent=0 // pred_check
    _
  $region19: #{tattention_forward.1} parent=0 // pred_check_branch
    %265 = sbr.rel (0) target = $region21
  $region20: #{tattention_forward.1} parent=0 // pred_region
    _
  $region21: #{tattention_forward.1} parent=0 // pred_fallthru
    _
  // Predicated region
  $region22: #{tattention_forward.1} parent=0 // pred_check
    _
  $region23: #{tattention_forward.1} parent=0 // pred_check_branch
    %267 = sbr.rel (0) target = $region25
  $region24: #{tattention_forward.1} parent=0 // pred_region
    _
  $region25: #{tattention_forward.1} parent=0 // pred_fallthru
    _

</llo_original>
